<compile_context>
chip_gen: v6e
topology: v6e:2x2x1
jax: 0.10.0
libtpu: 0.0.40
codegen_flags: <defaults>
</compile_context>

<pallas_src>
import jax
import jax.numpy as jnp
import numpy as np
from jax.experimental import pallas as pl
from jax.experimental.pallas import tpu as pltpu


def _attn_kernel(k_ref, q_ref, values_ref, wk_ref, wq_ref, b_ref, vw_ref,
                 out_ref, attw_ref):
    TB, S, Dv = values_ref.shape
    A = wk_ref.shape[0]

    # hid = tanh(k @ Wk^T + q @ Wq^T + b): the concat-Linear as two K=D MXU
    # matmuls (same FLOPs as one K=2D matmul, no concatenated slab in HBM).
    # bf16 operands (no-op if inputs already bf16), f32 accumulation.
    k = k_ref[...].astype(jnp.bfloat16)                               # (TB*S, D)
    q = q_ref[...].astype(jnp.bfloat16)                               # (TB*S, D)
    wk = wk_ref[...].astype(jnp.bfloat16)                             # (A, D)
    wq = wq_ref[...].astype(jnp.bfloat16)                             # (A, D)
    hid = jax.lax.dot_general(k, wk, (((1,), (1,)), ((), ())),
                              preferred_element_type=jnp.float32)
    hid = hid + jax.lax.dot_general(q, wq, (((1,), (1,)), ((), ())),
                                    preferred_element_type=jnp.float32)
    # TODO(synk): on v5e the f32 tanh over (TB*S, A) runs on the single f32-only
    # EUP and may become the binding slot once HBM traffic is cut (profile).
    hid = jnp.tanh(hid + b_ref[...])                                  # (TB*S, A) f32

    # scores[b, s] = vw . hid[b, s, :]  -- VPU multiply + XLU lane reduce; keeps
    # the softmax axis S in lanes and issues no M=1 MXU matmul.
    if S % 8 == 0:
        # sublane-split view of hid is free when S is a multiple of 8
        hid3 = hid.reshape(TB, S, A)
        scores = jnp.sum(hid3 * vw_ref[...].reshape(1, 1, A), axis=-1)   # (TB, S)
    else:
        # reduce over A on the 2-D hid first; only the tiny score vector relayouts
        scores = jnp.sum(hid * vw_ref[...], axis=-1, keepdims=True).reshape(TB, S)

    # Softmax over S per batch row; exact reciprocal (cheap, rows sum to ~1).
    m = jnp.max(scores, axis=-1, keepdims=True)
    e = jnp.exp(scores - m)
    denom = jnp.sum(e, axis=-1, keepdims=True)
    attw = e * pl.reciprocal(denom)                                   # (TB, S) f32

    # out[b, :] = sum_s attw[b, s] * values[b, s, :]  -- f32 VPU weighted sum,
    # no serialized 1xS MXU matmuls, no bf16 casts of values/attw.
    vals = values_ref[...].astype(jnp.float32)                        # (TB, S, Dv)
    out = jnp.sum(vals * attw[..., None], axis=1)                     # (TB, Dv)

    out_ref[...] = out.astype(out_ref.dtype)
    attw_ref[...] = attw.astype(attw_ref.dtype)


_VMEM_LIMIT_CACHE = [None]


def _vmem_limit_bytes():
    """Generation-aware scoped-VMEM budget (3/4 of physical; v7x-safe default)."""
    if _VMEM_LIMIT_CACHE[0] is None:
        phys = 64 * 1024 * 1024  # conservative default = v7x per-TC VMEM
        try:
            info = pltpu.get_tpu_info()
            cap = int(getattr(info, "vmem_capacity_bytes", 0) or 0)
            if cap > 0:
                phys = cap
        except Exception:
            pass
        _VMEM_LIMIT_CACHE[0] = (phys * 3) // 4   # 96 MiB v5e/v6e, 48 MiB v7x
    return _VMEM_LIMIT_CACHE[0]


def _pick_batch_block(B, S, D, Dv, A, kq_bytes, v_bytes, out_bytes, vmem_limit):
    """Batches per grid step (TB).

    Targets 512-1024 rows of matmul M (= TB*S) per step, capped so the
    double-buffered input/output blocks plus in-kernel intermediates stay within
    ~70% of the scoped VMEM budget.  When splitting B the block's sublane dim
    stays a multiple of 8 and a cdiv grid (masked last block) handles any B, so
    there is no unbounded TB=B fallback for large batches.
    """
    per_b = (2 * (2 * S * D * kq_bytes + S * Dv * v_bytes)   # k,q,values blocks, double-buffered
             + 2 * (Dv * out_bytes + S * 4)                  # output blocks, double-buffered
             + S * A * 6                                     # hid f32 + bf16 staging
             + S * 2 * D * 2                                 # bf16 k/q copies
             + S * Dv * 4                                    # f32 values copy
             + S * 16)                                       # scores / e / attw
    fixed = 2 * (2 * A * D * 4 + 2 * A * 4)                  # Wk, Wq, bias, vw blocks
    avail = max(int(vmem_limit * 0.7) - fixed, per_b)
    tb_vmem = max(1, avail // per_b)
    tb_rows = max(1, 1024 // max(S, 1))                      # 512-1024 M rows per step
    tb = int(min(B, tb_vmem, tb_rows))

    if tb >= B:
        # Whole batch fits in one step.  Keep >=2 grid steps for megacore
        # sharding when each half-step still has plenty of matmul rows.
        if B % 16 == 0 and (B // 2) * S >= 256:
            return B // 2
        return B

    # Splitting B: output block sublane dim must be a multiple of 8.  (If the
    # VMEM estimate wanted <8 batches per step, 8 is the smallest legal split;
    # the 0.7 budget factor leaves slack for that case.)
    tb = max(8, (tb // 8) * 8)
    if tb >= B:
        return B
    return tb


@jax.jit
def self_concat_attention(key, query, values, w_attn, b_attn, vw):
    """Forward pass of SelfConcatAttentionForSeq.

    key, query: (B, S, D); values: (B, S, Dv)
    w_attn: (A, 2D)  (nn.Linear(input*2, attention).weight)
    b_attn: (A,)     (nn.Linear bias)
    vw:     (1, A)   (nn.Linear(attention, 1, bias=False).weight)
    Returns (output (B, 1, Dv), attention_weights (B, S)).
    """
    B, S, D = key.shape
    Dv = values.shape[-1]
    A = w_attn.shape[0]

    vmem_limit = _vmem_limit_bytes()
    TB = _pick_batch_block(B, S, D, Dv, A,
                           key.dtype.itemsize, values.dtype.itemsize,
                           values.dtype.itemsize, vmem_limit)
    grid = (pl.cdiv(B, TB),)

    # Layout plumbing only (no HBM round trips over the big tensors): free
    # reshapes of key/query plus a one-time split of the tiny weight matrix.
    k_flat = key.reshape(B * S, D)
    q_flat = query.reshape(B * S, D)
    wk = w_attn[:, :D]
    wq = w_attn[:, D:]
    bias_row = b_attn.reshape(1, A)
    vw_row = vw.reshape(1, A)

    out_shapes = (
        jax.ShapeDtypeStruct((B, Dv), values.dtype),   # attention output (2-D, lane-dense)
        jax.ShapeDtypeStruct((B, S), jnp.float32),     # attention weights
    )
    grid_spec = pltpu.PrefetchScalarGridSpec(
        num_scalar_prefetch=0,
        grid=grid,
        in_specs=[
            pl.BlockSpec((TB * S, D), lambda b: (b, 0)),     # key   (flat, M rows)
            pl.BlockSpec((TB * S, D), lambda b: (b, 0)),     # query (flat, M rows)
            pl.BlockSpec((TB, S, Dv), lambda b: (b, 0, 0)),  # values
            pl.BlockSpec((A, D), lambda b: (0, 0)),          # Wk
            pl.BlockSpec((A, D), lambda b: (0, 0)),          # Wq
            pl.BlockSpec((1, A), lambda b: (0, 0)),          # bias
            pl.BlockSpec((1, A), lambda b: (0, 0)),          # scoring vector
        ],
        out_specs=[
            pl.BlockSpec((TB, Dv), lambda b: (b, 0)),
            pl.BlockSpec((TB, S), lambda b: (b, 0)),
        ],
    )
    out, attw = pl.pallas_call(
        _attn_kernel,
        out_shape=out_shapes,
        grid_spec=grid_spec,
        compiler_params=pltpu.CompilerParams(
            dimension_semantics=("parallel",),
            vmem_limit_bytes=int(vmem_limit)),
    )(k_flat, q_flat, values, wk, wq, bias_row, vw_row)
    # PyTorch contract: bmm output is (B, 1, Dv); attention weights are (B, S).
    return out[:, None, :], attw


def reference(key, query, values, w_full, bias, vw_row):
    concat = jnp.concatenate([key, query], axis=-1)
    hid = jnp.tanh(concat @ w_full.T + bias[None, None, :])
    scores = (hid @ vw_row.T)[..., 0]                 # (B, S)
    attw = jax.nn.softmax(scores, axis=-1)
    out = jnp.einsum("bs,bsd->bd", attw, values)[:, None, :]
    return out, attw


if __name__ == "__main__":
    B, S = 2, 8
    input_size = 32          # feature dim of key / query / values
    attention_size = 32

    root = jax.random.PRNGKey(0)
    kk, kqr, kv, kw, kb, kl = jax.random.split(root, 6)

    key = jax.random.normal(kk, (B, S, input_size), dtype=jnp.float32)
    query = jax.random.normal(kqr, (B, S, input_size), dtype=jnp.float32)
    values = jax.random.normal(kv, (B, S, input_size), dtype=jnp.float32)

    # Deterministic parameter init mimicking nn.Linear shapes:
    #   attention.weight: (attention_size, 2*input_size), attention.bias: (attention_size,)
    #   linear.weight:    (1, attention_size)  (no bias)
    fan_in = 2 * input_size
    bound = 1.0 / np.sqrt(fan_in)
    w_full = jax.random.uniform(kw, (attention_size, 2 * input_size),
                                minval=-bound, maxval=bound, dtype=jnp.float32)
    bias = jax.random.uniform(kb, (attention_size,),
                              minval=-bound, maxval=bound, dtype=jnp.float32)
    bound2 = 1.0 / np.sqrt(attention_size)
    vw = jax.random.uniform(kl, (1, attention_size),
                            minval=-bound2, maxval=bound2, dtype=jnp.float32)

    out, attw = self_concat_attention(key, query, values, w_full, bias, vw)
    out = jax.block_until_ready(out)
    attw = jax.block_until_ready(attw)

    out_ref, attw_ref = reference(key, query, values, w_full, bias, vw)

    assert out.shape == (B, 1, input_size)
    assert attw.shape == (B, S)
    # Tolerance reflects bf16 MXU operands (f32 accumulation) for the hidden
    # layer vs. the pure-f32 reference; softmax/weighted-sum are f32.
    np.testing.assert_allclose(np.asarray(attw), np.asarray(attw_ref), rtol=2e-2, atol=2e-2)
    np.testing.assert_allclose(np.asarray(out), np.asarray(out_ref), rtol=2e-2, atol=2e-2)

    print("KERNEL_OK")
</pallas_src>

<mosaic_0001>
module attributes {stable_mosaic.version = 11 : i64} {
  func.func @_attn_kernel(%arg0: i32, %arg1: memref<16x32xf32, #tpu.memory_space<vmem>>, %arg2: memref<16x32xf32, #tpu.memory_space<vmem>>, %arg3: memref<2x8x32xf32, #tpu.memory_space<vmem>>, %arg4: memref<32x32xf32, #tpu.memory_space<vmem>>, %arg5: memref<32x32xf32, #tpu.memory_space<vmem>>, %arg6: memref<1x32xf32, #tpu.memory_space<vmem>>, %arg7: memref<1x32xf32, #tpu.memory_space<vmem>>, %arg8: memref<2x32xf32, #tpu.memory_space<vmem>>, %arg9: memref<2x8xf32, #tpu.memory_space<vmem>>) attributes {dimension_semantics = [#tpu.dimension_semantics<parallel>], iteration_bounds = array<i64: 1>, scalar_prefetch = 0 : i64, scratch_operands = 0 : i64, tpu.core_type = #tpu.core_type<tc>, window_params = [{transform_indices = @transform_0, window_bounds = array<i64: 16, 32>}, {transform_indices = @transform_1, window_bounds = array<i64: 16, 32>}, {transform_indices = @transform_2, window_bounds = array<i64: 2, 8, 32>}, {pipeline_mode = #tpu.pipeline_mode<synchronous>, transform_indices = @transform_3, window_bounds = array<i64: 32, 32>}, {pipeline_mode = #tpu.pipeline_mode<synchronous>, transform_indices = @transform_4, window_bounds = array<i64: 32, 32>}, {pipeline_mode = #tpu.pipeline_mode<synchronous>, transform_indices = @transform_5, window_bounds = array<i64: 1, 32>}, {pipeline_mode = #tpu.pipeline_mode<synchronous>, transform_indices = @transform_6, window_bounds = array<i64: 1, 32>}, {transform_indices = @transform_7, window_bounds = array<i64: 2, 32>}, {transform_indices = @transform_8, window_bounds = array<i64: 2, 8>}]} {
    %c0 = arith.constant 0 : index
    %c0_0 = arith.constant 0 : index
    %0 = vector.load %arg1[%c0, %c0_0] : memref<16x32xf32, #tpu.memory_space<vmem>>, vector<16x32xf32>
    %1 = arith.truncf %0 : vector<16x32xf32> to vector<16x32xbf16>
    %c0_1 = arith.constant 0 : index
    %c0_2 = arith.constant 0 : index
    %2 = vector.load %arg2[%c0_1, %c0_2] : memref<16x32xf32, #tpu.memory_space<vmem>>, vector<16x32xf32>
    %3 = arith.truncf %2 : vector<16x32xf32> to vector<16x32xbf16>
    %c0_3 = arith.constant 0 : index
    %c0_4 = arith.constant 0 : index
    %4 = vector.load %arg4[%c0_3, %c0_4] : memref<32x32xf32, #tpu.memory_space<vmem>>, vector<32x32xf32>
    %5 = arith.truncf %4 : vector<32x32xf32> to vector<32x32xbf16>
    %c0_5 = arith.constant 0 : index
    %c0_6 = arith.constant 0 : index
    %6 = vector.load %arg5[%c0_5, %c0_6] : memref<32x32xf32, #tpu.memory_space<vmem>>, vector<32x32xf32>
    %7 = arith.truncf %6 : vector<32x32xf32> to vector<32x32xbf16>
    %cst = arith.constant dense<0.000000e+00> : vector<16x32xf32>
    %8 = tpu.matmul %1, %5, %cst {dimension_numbers = #tpu.dot_dimension_numbers<[1], [1], [0], [0], [0, 0, 1, 0], [], []>} : vector<16x32xbf16>, vector<32x32xbf16>, vector<16x32xf32> -> vector<16x32xf32>
    %cst_7 = arith.constant dense<0.000000e+00> : vector<16x32xf32>
    %9 = tpu.matmul %3, %7, %cst_7 {dimension_numbers = #tpu.dot_dimension_numbers<[1], [1], [0], [0], [0, 0, 1, 0], [], []>} : vector<16x32xbf16>, vector<32x32xbf16>, vector<16x32xf32> -> vector<16x32xf32>
    %10 = arith.addf %8, %9 : vector<16x32xf32>
    %c0_8 = arith.constant 0 : index
    %c0_9 = arith.constant 0 : index
    %11 = vector.load %arg6[%c0_8, %c0_9] : memref<1x32xf32, #tpu.memory_space<vmem>>, vector<1x32xf32>
    %12 = vector.broadcast %11 : vector<1x32xf32> to vector<16x32xf32>
    %13 = arith.addf %10, %12 : vector<16x32xf32>
    %14 = math.tanh %13 : vector<16x32xf32>
    %15 = vector.shape_cast %14 : vector<16x32xf32> to vector<2x8x32xf32>
    %c0_10 = arith.constant 0 : index
    %c0_11 = arith.constant 0 : index
    %16 = vector.load %arg7[%c0_10, %c0_11] : memref<1x32xf32, #tpu.memory_space<vmem>>, vector<1x32xf32>
    %17 = vector.shape_cast %16 : vector<1x32xf32> to vector<1x1x32xf32>
    %18 = vector.broadcast %17 : vector<1x1x32xf32> to vector<2x8x32xf32>
    %19 = arith.mulf %15, %18 : vector<2x8x32xf32>
    %cst_12 = arith.constant dense<0.000000e+00> : vector<2x8xf32>
    %20 = vector.multi_reduction <add>, %19, %cst_12 [2] : vector<2x8x32xf32> to vector<2x8xf32>
    %cst_13 = arith.constant dense<0xFF800000> : vector<2xf32>
    %21 = vector.multi_reduction <maximumf>, %20, %cst_13 [1] : vector<2x8xf32> to vector<2xf32>
    %22 = vector.shape_cast %21 : vector<2xf32> to vector<2x1xf32>
    %23 = vector.broadcast %22 : vector<2x1xf32> to vector<2x8xf32>
    %24 = arith.subf %20, %23 : vector<2x8xf32>
    %25 = math.exp %24 : vector<2x8xf32>
    %cst_14 = arith.constant dense<0.000000e+00> : vector<2xf32>
    %26 = vector.multi_reduction <add>, %25, %cst_14 [1] : vector<2x8xf32> to vector<2xf32>
    %27 = vector.shape_cast %26 : vector<2xf32> to vector<2x1xf32>
    %28 = tpu.reciprocal %27 : vector<2x1xf32> -> vector<2x1xf32>
    %29 = vector.broadcast %28 : vector<2x1xf32> to vector<2x8xf32>
    %30 = arith.mulf %25, %29 : vector<2x8xf32>
    %c0_15 = arith.constant 0 : index
    %c0_16 = arith.constant 0 : index
    %c0_17 = arith.constant 0 : index
    %31 = vector.load %arg3[%c0_15, %c0_16, %c0_17] : memref<2x8x32xf32, #tpu.memory_space<vmem>>, vector<2x8x32xf32>
    %32 = vector.shape_cast %30 : vector<2x8xf32> to vector<2x8x1xf32>
    %33 = vector.broadcast %32 : vector<2x8x1xf32> to vector<2x8x32xf32>
    %34 = arith.mulf %31, %33 : vector<2x8x32xf32>
    %cst_18 = arith.constant dense<0.000000e+00> : vector<2x32xf32>
    %35 = vector.multi_reduction <add>, %34, %cst_18 [1] : vector<2x8x32xf32> to vector<2x32xf32>
    %c0_19 = arith.constant 0 : index
    %c0_20 = arith.constant 0 : index
    %36 = vector.load %arg8[%c0_19, %c0_20] : memref<2x32xf32, #tpu.memory_space<vmem>>, vector<2x32xf32>
    tpu.vector_store %arg8[%c0_19, %c0_20], %35 {strides = array<i32>} : memref<2x32xf32, #tpu.memory_space<vmem>>, vector<2x32xf32>,
    %c0_21 = arith.constant 0 : index
    %c0_22 = arith.constant 0 : index
    %37 = vector.load %arg9[%c0_21, %c0_22] : memref<2x8xf32, #tpu.memory_space<vmem>>, vector<2x8xf32>
    tpu.vector_store %arg9[%c0_21, %c0_22], %30 {strides = array<i32>} : memref<2x8xf32, #tpu.memory_space<vmem>>, vector<2x8xf32>,
    return
  }
  func.func @transform_0(%arg0: i32) -> (i32, i32) {
    %c0_i32 = arith.constant 0 : i32
    %c0_i32_0 = arith.constant 0 : i32
    return %arg0, %c0_i32 : i32, i32
  }
  func.func @transform_1(%arg0: i32) -> (i32, i32) {
    %c0_i32 = arith.constant 0 : i32
    %c0_i32_0 = arith.constant 0 : i32
    return %arg0, %c0_i32 : i32, i32
  }
  func.func @transform_2(%arg0: i32) -> (i32, i32, i32) {
    %c0_i32 = arith.constant 0 : i32
    %c0_i32_0 = arith.constant 0 : i32
    %c0_i32_1 = arith.constant 0 : i32
    return %arg0, %c0_i32, %c0_i32_0 : i32, i32, i32
  }
  func.func @transform_3(%arg0: i32) -> (i32, i32) {
    %c0_i32 = arith.constant 0 : i32
    %c0_i32_0 = arith.constant 0 : i32
    %c0_i32_1 = arith.constant 0 : i32
    return %c0_i32, %c0_i32_0 : i32, i32
  }
  func.func @transform_4(%arg0: i32) -> (i32, i32) {
    %c0_i32 = arith.constant 0 : i32
    %c0_i32_0 = arith.constant 0 : i32
    %c0_i32_1 = arith.constant 0 : i32
    return %c0_i32, %c0_i32_0 : i32, i32
  }
  func.func @transform_5(%arg0: i32) -> (i32, i32) {
    %c0_i32 = arith.constant 0 : i32
    %c0_i32_0 = arith.constant 0 : i32
    %c0_i32_1 = arith.constant 0 : i32
    return %c0_i32, %c0_i32_0 : i32, i32
  }
  func.func @transform_6(%arg0: i32) -> (i32, i32) {
    %c0_i32 = arith.constant 0 : i32
    %c0_i32_0 = arith.constant 0 : i32
    %c0_i32_1 = arith.constant 0 : i32
    return %c0_i32, %c0_i32_0 : i32, i32
  }
  func.func @transform_7(%arg0: i32) -> (i32, i32) {
    %c0_i32 = arith.constant 0 : i32
    %c0_i32_0 = arith.constant 0 : i32
    return %arg0, %c0_i32 : i32, i32
  }
  func.func @transform_8(%arg0: i32) -> (i32, i32) {
    %c0_i32 = arith.constant 0 : i32
    %c0_i32_0 = arith.constant 0 : i32
    return %arg0, %c0_i32 : i32, i32
  }
}

</mosaic_0001>

<llo_original>
// kernel: self_concat_attention.1
$region0: #{self_concat_attention.1}
  #allocation0 [shape = 'u32[]', space=smem, size = 0x4, offset = 0x4, fixed_abs, tag = 'smem constant byte address 0x4 - core index']
  #allocation1 [shape = 'u32[144,128]{1,0:T(1,128)}', space=vmem, size = 0x12000, scoped, tag = 'internal scratch']
  %s0 = inlined_call_operand.vmem [shape: f32[16,32], index: 0, kind: input, shape index: {}]
  %s1 = inlined_call_operand.vmem [shape: f32[16,32], index: 1, kind: input, shape index: {}]
  %s2 = inlined_call_operand.vmem [shape: f32[2,8,32], index: 2, kind: input, shape index: {}]
  %s3 = inlined_call_operand.vmem [shape: f32[32,32], index: 3, kind: input, shape index: {}]
  %s4 = inlined_call_operand.vmem [shape: f32[32,32], index: 4, kind: input, shape index: {}]
  %s5 = inlined_call_operand.vmem [shape: f32[1,32], index: 5, kind: input, shape index: {}]
  %s6 = inlined_call_operand.vmem [shape: f32[1,32], index: 6, kind: input, shape index: {}]
  %s7 = inlined_call_operand.hbm [shape: f32[2,32], index: 7, kind: output, shape index: {0}]
  %s8 = inlined_call_operand.hbm [shape: f32[2,8], index: 8, kind: output, shape index: {1}]
  %9 = xla_tuple %s7, %s8
  %s10 = sld [smem:[#allocation0]]
  $region46: #{self_concat_attention.1} parent=0
    _
  %s12 = ssub.s32 1, %s10
  %s13 = scalar_select 0, %s12, %s10
  $region1: #{self_concat_attention.1} parent=0
    #allocation2 [shape = 'u8[1024]{0}', space=vmem, size = 0x400, scoped, tag = 'output window, operand 0, single buffered']
    #allocation3 [shape = 's32[1]{0}', space=sflag, size = 0x4, scoped, tag = 'scoped memory for self_concat_attention.1']
    #allocation4 [shape = 'u8[1024]{0}', space=vmem, size = 0x400, scoped, tag = 'output window, operand 1, single buffered']
    #allocation5 [shape = 's32[1]{0}', space=sflag, size = 0x4, scoped, tag = 'scoped memory for self_concat_attention.1']
    %14 = vsyncpa [#allocation3], 0
    %15 = vsyncpa [#allocation5], 0
    // Predicated region
    $region2: #{self_concat_attention.1} parent=1 // pred_check
      _
    $region3: #{self_concat_attention.1} parent=1 // pred_check_branch
      %17 = sbr.rel (0) target = $region5
    $region4: #{self_concat_attention.1} parent=1 // pred_region
      _
    $region5: #{self_concat_attention.1} parent=1 // pred_fallthru
      _
    // Predicated region
    $region6: #{self_concat_attention.1} parent=1 // pred_check
      _
    $region7: #{self_concat_attention.1} parent=1 // pred_check_branch
      %19 = sbr.rel (0) target = $region9
    $region8: #{self_concat_attention.1} parent=1 // pred_region
      _
    $region9: #{self_concat_attention.1} parent=1 // pred_fallthru
      _
    // Predicated region
    $region10: #{self_concat_attention.1} parent=1 // pred_check
      _
    $region11: #{self_concat_attention.1} parent=1 // pred_check_branch
      %21 = sbr.rel (0) target = $region13
    $region12: #{self_concat_attention.1} parent=1 // pred_region
      _
    $region13: #{self_concat_attention.1} parent=1 // pred_fallthru
      _
    // Predicated region
    $region14: #{self_concat_attention.1} parent=1 // pred_check
      _
    $region15: #{self_concat_attention.1} parent=1 // pred_check_branch
      %23 = sbr.rel (0) target = $region17
    $region16: #{self_concat_attention.1} parent=1 // pred_region
      _
    $region17: #{self_concat_attention.1} parent=1 // pred_fallthru
      _
    // Predicated region
    $region18: #{self_concat_attention.1} parent=1 // pred_check
      _
    $region19: #{self_concat_attention.1} parent=1 // pred_check_branch
      %25 = sbr.rel (0) target = $region21
    $region20: #{self_concat_attention.1} parent=1 // pred_region
      _
    $region21: #{self_concat_attention.1} parent=1 // pred_fallthru
      _
    // Predicated region
    $region22: #{self_concat_attention.1} parent=1 // pred_check
      _
    $region23: #{self_concat_attention.1} parent=1 // pred_check_branch
      %27 = sbr.rel (0) target = $region25
    $region24: #{self_concat_attention.1} parent=1 // pred_region
      _
    $region25: #{self_concat_attention.1} parent=1 // pred_fallthru
      _
    // Predicated region
    $region26: #{self_concat_attention.1} parent=1 // pred_check
      _
    $region27: #{self_concat_attention.1} parent=1 // pred_check_branch
      %29 = sbr.rel (0) target = $region29
    $region28: #{self_concat_attention.1} parent=1 // pred_region
      _
    $region29: #{self_concat_attention.1} parent=1 // pred_fallthru
      _
    %v31 = vld [vmem:[%s0] sm:$0xff]
    %v32 = vld [vmem:[%s0 + $0x8] sm:$0xff]
    %v33 = vpack.c.bf16 %v32, %v31
    %v34 = vld [vmem:[%s1] sm:$0xff]
    %v35 = vld [vmem:[%s1 + $0x8] sm:$0xff]
    %v36 = vpack.c.bf16 %v35, %v34
    %v37 = vld [vmem:[%s3] sm:$0xff]
    %v38 = vld [vmem:[%s3 + $0x8] sm:$0xff]
    %v39 = vld [vmem:[%s3 + $0x10] sm:$0xff]
    %v40 = vld [vmem:[%s3 + $0x18] sm:$0xff]
    %v41 = vpack.c.bf16 %v38, %v37
    %v42 = vpack.c.bf16 %v40, %v39
    %v43 = vld [vmem:[%s4] sm:$0xff]
    %v44 = vld [vmem:[%s4 + $0x8] sm:$0xff]
    %v45 = vld [vmem:[%s4 + $0x10] sm:$0xff]
    %v46 = vld [vmem:[%s4 + $0x18] sm:$0xff]
    %v47 = vpack.c.bf16 %v44, %v43
    %v48 = vpack.c.bf16 %v46, %v45
    %vm49 = vcmask 261120
    %v51 = vsel %vm49, %v36, 0
    %v54 = vsel %vm49, %v47, 0
    %v57 = vsel %vm49, %v48, 0
    %59 = vmatprep.subr.bf16.mxu0 0
    %60 = vmatpush1.bf16.xpose.msra.mxu0 0
    %61 = vmatprep.subr.bf16.mxu0 0
    %62 = vmatpush1.bf16.xpose.msra.mxu0 0
    %63 = vmatprep.subr.bf16.mxu0 0
    %64 = vmatpush1.bf16.xpose.msra.mxu0 0
    %65 = vmatprep.subr.bf16.mxu0 0
    %66 = vmatpush1.bf16.xpose.msra.mxu0 0
    %67 = vmatprep.subr.bf16.mxu0 0
    %68 = vmatpush1.bf16.xpose.msra.mxu0 0
    %69 = vmatprep.subr.bf16.mxu0 0
    %70 = vmatpush1.bf16.xpose.msra.mxu0 0
    %71 = vmatprep.subr.bf16.mxu0 0
    %72 = vmatpush1.bf16.xpose.msra.mxu0 %v57
    %73 = vmatprep.subr.bf16.mxu0 0
    %74 = vmatpush1.bf16.xpose.msra.mxu0 %v54
    %75 = vmatprep.subr.bf16.mxu0 0
    %76 = vmatpush2.bf16.xpose.msra.mxu0 0
    %77 = vmatprep.subr.bf16.mxu0 0
    %78 = vmatpush2.bf16.xpose.msra.mxu0 0
    %79 = vmatprep.subr.bf16.mxu0 0
    %80 = vmatpush2.bf16.xpose.msra.mxu0 0
    %81 = vmatprep.subr.bf16.mxu0 0
    %82 = vmatpush2.bf16.xpose.msra.mxu0 0
    %83 = vmatprep.subr.bf16.mxu0 0
    %84 = vmatpush2.bf16.xpose.msra.mxu0 0
    %85 = vmatprep.subr.bf16.mxu0 0
    %86 = vmatpush2.bf16.xpose.msra.mxu0 0
    %87 = vmatprep.subr.bf16.mxu0 0
    %88 = vmatpush2.bf16.xpose.msra.mxu0 0
    %89 = vmatprep.subr.bf16.mxu0 0
    %90 = vmatpush2.bf16.xpose.msra.mxu0 0
    %91 = vmatprep.mubr.bf16.mxu0 0
    %92 = vmatmul.mubr.bf16.gmra.mxu0 %v51
    %v93 = vpop.f32.mrf.mxu0
    %v94 = vadd.f32 0.0, %v93
    %v95 = vpop.f32.mrf.mxu0
    %v96 = vpop.f32.mrf.mxu0
    %v97 = vadd.f32 0.0, %v96
    %v98 = vpop.f32.mrf.mxu0
    %99 = vdwg.mxu0
    %v101 = vsel %vm49, %v33, 0
    %v104 = vsel %vm49, %v41, 0
    %v107 = vsel %vm49, %v42, 0
    %109 = vmatprep.subr.bf16.mxu0 0
    %110 = vmatpush1.bf16.xpose.msra.mxu0 0
    %111 = vmatprep.subr.bf16.mxu0 0
    %112 = vmatpush1.bf16.xpose.msra.mxu0 0
    %113 = vmatprep.subr.bf16.mxu0 0
    %114 = vmatpush1.bf16.xpose.msra.mxu0 0
    %115 = vmatprep.subr.bf16.mxu0 0
    %116 = vmatpush1.bf16.xpose.msra.mxu0 0
    %117 = vmatprep.subr.bf16.mxu0 0
    %118 = vmatpush1.bf16.xpose.msra.mxu0 0
    %119 = vmatprep.subr.bf16.mxu0 0
    %120 = vmatpush1.bf16.xpose.msra.mxu0 0
    %121 = vmatprep.subr.bf16.mxu0 0
    %122 = vmatpush1.bf16.xpose.msra.mxu0 %v107
    %123 = vmatprep.subr.bf16.mxu0 0
    %124 = vmatpush1.bf16.xpose.msra.mxu0 %v104
    %125 = vmatprep.subr.bf16.mxu0 0
    %126 = vmatpush2.bf16.xpose.msra.mxu0 0
    %127 = vmatprep.subr.bf16.mxu0 0
    %128 = vmatpush2.bf16.xpose.msra.mxu0 0
    %129 = vmatprep.subr.bf16.mxu0 0
    %130 = vmatpush2.bf16.xpose.msra.mxu0 0
    %131 = vmatprep.subr.bf16.mxu0 0
    %132 = vmatpush2.bf16.xpose.msra.mxu0 0
    %133 = vmatprep.subr.bf16.mxu0 0
    %134 = vmatpush2.bf16.xpose.msra.mxu0 0
    %135 = vmatprep.subr.bf16.mxu0 0
    %136 = vmatpush2.bf16.xpose.msra.mxu0 0
    %137 = vmatprep.subr.bf16.mxu0 0
    %138 = vmatpush2.bf16.xpose.msra.mxu0 0
    %139 = vmatprep.subr.bf16.mxu0 0
    %140 = vmatpush2.bf16.xpose.msra.mxu0 0
    %141 = vmatprep.mubr.bf16.mxu0 0
    %142 = vmatmul.mubr.bf16.gmra.mxu0 %v101
    %v143 = vpop.f32.mrf.mxu0
    %v144 = vadd.f32 %v94, %v143
    %v145 = vpop.f32.mrf.mxu0
    %v146 = vpop.f32.mrf.mxu0
    %v147 = vadd.f32 %v97, %v146
    %v148 = vpop.f32.mrf.mxu0
    %149 = vdwg.mxu0
    %v150 = vld [vmem:[%s5] sm:$0x1]
    %v152 = vlaneseq
    %v153 = vshrl.u32 %v152, 7
    %v154 = vsub.s32 0, %v153
    %v155 = vrot.slane %v150, %v154
    %v157 = vadd.f32 %v144, %v155
    %v158 = vadd.f32 %v147, %v155
    %v159 = vtanh.pop %v157
    %v160 = vtanh.pop %v158
    %v161 = vld [vmem:[%s6] sm:$0x1]
    %v163 = vlaneseq
    %v164 = vshrl.u32 %v163, 7
    %v165 = vsub.s32 0, %v164
    %v166 = vrot.slane %v161, %v165
    %v168 = vmul.f32 %v159, %v166
    %v169 = vmul.f32 %v160, %v166
    %v170 = vsel %vm49, %v168, 0.0
    %171 = vadd.xlane.f32.xlu0 %v170
    %v172 = vpop.xlane.xlu0 %171
    %v173 = vsel %vm49, %v169, 0.0
    %174 = vadd.xlane.f32.xlu0 %v173
    %v175 = vpop.xlane.xlu0 %174
    %v178 = vlaneseq
    %v179 = vand.u32 %v178, 127
    %v180 = vlaneseq
    %v181 = vshrl.u32 %v180, 7
    %v182 = vsub.s32 %v179, %v181
    %v183 = vrot.slane %v172, %v182
    %v184 = vlaneseq
    %v185 = vshrl.u32 %v184, 7
    %v186 = vsub.s32 %v179, %v185
    %v187 = vrot.slane %v175, %v186
    %vm188 = vcmask 1041409
    %v189 = vsel %vm188, %v187, %v183
    %vm191 = vcmask 58368
    %v192 = vsel %vm191, %v189, -inf
    %193 = vmax.xlane.f32.xlu0 %v192
    %v194 = vpop.xlane.xlu0 %193
    %v196 = vlaneseq
    %v197 = vshrl.u32 %v196, 7
    %v198 = vsub.s32 0, %v197
    %v199 = vrot.slane %v194, %v198
    %v200 = vlaneseq
    %v201 = vshrl.u32 %v200, 7
    %v202 = vsub.s32 1, %v201
    %v203 = vrot.slane %v194, %v202
    %v206 = vsub.f32 %v172, %v199
    %v207 = vsub.f32 %v175, %v203
    %v208 = vmul.f32 %v206, 1.442695
    %v209 = vpow.pop %v208
    %v210 = vmul.f32 %v207, 1.442695
    %v211 = vpow.pop %v210
    %214 = vset.pattern.permute.xlu0 0
    %215 = vperm.xlu0 %214, %v209
    %v216 = vpop.permute.xlu0 %215
    %217 = vset.pattern.permute.xlu0 0
    %218 = vperm.xlu0 %217, %v211
    %v219 = vpop.permute.xlu0 %218
    %v220 = vlaneseq
    %v221 = vshrl.u32 %v220, 7
    %v222 = vsub.s32 %v179, %v221
    %v223 = vrot.slane %v216, %v222
    %v224 = vlaneseq
    %v225 = vshrl.u32 %v224, 7
    %v226 = vsub.s32 %v179, %v225
    %v227 = vrot.slane %v219, %v226
    %v228 = vsel %vm188, %v227, %v223
    %v230 = vsel %vm191, %v228, 0.0
    %231 = vadd.xlane.f32.xlu0 %v230
    %v232 = vpop.xlane.xlu0 %231
    %v233 = vrcp.pop %v232
    %v235 = vlaneseq
    %v236 = vshrl.u32 %v235, 7
    %v237 = vsub.s32 0, %v236
    %v238 = vrot.slane %v233, %v237
    %v239 = vlaneseq
    %v240 = vshrl.u32 %v239, 7
    %v241 = vsub.s32 1, %v240
    %v242 = vrot.slane %v233, %v241
    %v245 = vmul.f32 %v209, %v238
    %v246 = vmul.f32 %v211, %v242
    %v247 = vld [vmem:[%s2] sm:$0xff]
    %v248 = vld [vmem:[%s2 + $0x8] sm:$0xff]
    %250 = vset.pattern.permute.xlu0 0
    %251 = vperm.xlu0 %250, %v245
    %v252 = vpop.permute.xlu0 %251
    %255 = vset.pattern.permute.xlu0 0
    %256 = vperm.xlu0 %255, %v246
    %v257 = vpop.permute.xlu0 %256
    %v259 = vmul.f32 %v247, %v252
    %v260 = vmul.f32 %v248, %v257
    %v261 = vsel %vm49, %v259, 0.0
    %v262 = vrot.slane %v261, 4
    %v263 = vadd.f32 %v261, %v262
    %v264 = vrot.slane %v263, 2
    %v265 = vadd.f32 %v263, %v264
    %v266 = vrot.slane %v265, 1
    %v267 = vadd.f32 %v265, %v266
    %v268 = vsel %vm49, %v260, 0.0
    %v269 = vrot.slane %v268, 4
    %v270 = vadd.f32 %v268, %v269
    %v271 = vrot.slane %v270, 2
    %v272 = vadd.f32 %v270, %v271
    %v273 = vrot.slane %v272, 1
    %v274 = vadd.f32 %v272, %v273
    %v277 = vsel %vm188, %v274, %v267
    %vm279 = vcmask 254976
    %280 = vst.msk [vmem:[#allocation2] sm:$0x3] %vm279, %v277
    %v281 = vlaneseq
    %v282 = vshrl.u32 %v281, 7
    %v283 = vsub.s32 %v179, %v282
    %v284 = vrot.slane %v252, %v283
    %v285 = vlaneseq
    %v286 = vshrl.u32 %v285, 7
    %v287 = vsub.s32 %v179, %v286
    %v288 = vrot.slane %v257, %v287
    %v289 = vsel %vm188, %v288, %v284
    %291 = vst.msk [vmem:[#allocation4] sm:$0x3] %vm191, %v289
    // Predicated region
    $region30: #{self_concat_attention.1} parent=1 // pred_check
      _
    $region31: #{self_concat_attention.1} parent=1 // pred_check_branch
      %293 = sbr.rel (0) target = $region33
    $region32: #{self_concat_attention.1} parent=1 // pred_region
      %s295 = ssub.s32 32, 32
      %296 = vsyncadd [#allocation3], %s295
      %s298 = sshll.u32 [#allocation2], 4
      %s299 = int_to_ptr.vmem [resolvable:$true] %s298
      %301 = dma.vmem_to_hbm [thread:$0]  %s299, 32, %s7, [#allocation3]
    $region33: #{self_concat_attention.1} parent=1 // pred_fallthru
      _
    // Predicated region
    $region34: #{self_concat_attention.1} parent=1 // pred_check
      _
    $region35: #{self_concat_attention.1} parent=1 // pred_check_branch
      %303 = sbr.rel (0) target = $region37
    $region36: #{self_concat_attention.1} parent=1 // pred_region
      %s305 = ssub.s32 32, 32
      %306 = vsyncadd [#allocation5], %s305
      %s308 = sshll.u32 [#allocation4], 4
      %s309 = int_to_ptr.vmem [resolvable:$true] %s308
      %311 = dma.vmem_to_hbm [thread:$0]  %s309, 32, %s8, [#allocation5]
    $region37: #{self_concat_attention.1} parent=1 // pred_fallthru
      _
    // Predicated region
    $region38: #{self_concat_attention.1} parent=1 // pred_check
      _
    $region39: #{self_concat_attention.1} parent=1 // pred_check_branch
      %313 = sbr.rel (0) target = $region41
    $region40: #{self_concat_attention.1} parent=1 // pred_region
      %314 = dma.done [#allocation3], 32
    $region41: #{self_concat_attention.1} parent=1 // pred_fallthru
      _
    // Predicated region
    $region42: #{self_concat_attention.1} parent=1 // pred_check
      _
    $region43: #{self_concat_attention.1} parent=1 // pred_check_branch
      %316 = sbr.rel (0) target = $region45
    $region44: #{self_concat_attention.1} parent=1 // pred_region
      %317 = dma.done [#allocation5], 32
    $region45: #{self_concat_attention.1} parent=1 // pred_fallthru
      _
    %318 = vsyncpa [#allocation3], 1
    %319 = vsyncpa [#allocation5], 1

</llo_original>
